<compile_context>
chip_gen: v5e
topology: v5e:2x2
jax: 0.10.0
libtpu: 0.0.40
codegen_flags: <defaults>
</compile_context>

<pallas_src>
import functools

import jax
import jax.numpy as jnp
from jax.experimental import pallas as pl
from jax.experimental.pallas import tpu as pltpu

_LANE = 128


def _round_up(x, m):
    return (x + m - 1) // m * m


def _device_budgets():
    """(vmem_limit_bytes, per-step tile budget, target GEMM rows) by device.

    v7x has only 64 MiB VMEM per TensorCore -> cap the scoped limit at 48 MiB
    and keep per-step tiles ~7 MiB; v5e/v6e (128 MiB VMEM) get 64 MiB / ~28 MiB
    budgets and larger row tiles (fewer grid steps, closer to HBM roofline).
    """
    try:
        cap = int(getattr(pltpu.get_tpu_info(), "vmem_capacity_bytes", 0) or 0)
    except Exception:
        cap = 0
    if cap:
        small = cap <= 96 * 1024 * 1024
    else:
        try:
            small = "v7" in jax.devices()[0].device_kind.lower()
        except Exception:
            small = False
    if small:
        return 48 * 1024 * 1024, 7 * 1024 * 1024, 512
    return 64 * 1024 * 1024, 28 * 1024 * 1024, 1024


def _pick_row_tile(m_total, per_row_bytes, *, budget, target_rows):
    """Pick a GEMM row-tile: fits the per-step VMEM budget, ~target_rows rows,
    multiple of 256 (v6e/v7x MXU) when possible, and leaves >= 2 grid steps."""
    cap_rows = max(8, budget // max(per_row_bytes, 1))
    tm = max(8, min(target_rows, cap_rows, m_total))
    if m_total >= 16:                       # keep >= 2 steps (both v7x TCs busy)
        tm = min(tm, max(8, m_total // 2))
    if tm >= 256:
        tm = tm // 256 * 256
    else:
        tm = max(8, tm // 8 * 8)
    return int(tm)


def _pick_group(n_tiles, tile_bytes, *, budget):
    """Largest divisor g of n_tiles whose grouped pass-2 tile fits `budget`,
    preferring to keep >= 2 grid steps (megacore)."""
    divs = [g for g in range(1, n_tiles + 1) if n_tiles % g == 0]
    fits = [g for g in divs if g * tile_bytes <= budget] or [1]
    pref = [g for g in fits if n_tiles // g >= 2] or fits
    return max(pref)


def _conv_stats_kernel(x_ref, w_ref, b_ref, y_ref, psum_ref, pssq_ref):
    """One GEMM row tile: conv-as-single-GEMM + per-tile channel statistics.

    x_ref:    (TM, K*K*Cin)   im2col rows
    w_ref:    (K*K*Cin, Cpad) conv weights, lane-dense Cout
    b_ref:    (1, Cpad)       conv bias (f32)
    y_ref:    (TM, Cpad)      conv output (pre-BN)
    psum_ref: (1, 1, Cpad)    per-tile channel sum (f32)
    pssq_ref: (1, 1, Cpad)    per-tile channel sum of squares (f32)
    """
    acc = jnp.dot(x_ref[...], w_ref[...], preferred_element_type=jnp.float32)
    acc = acc + b_ref[...]                         # f32 (TM, Cpad)
    y_ref[...] = acc.astype(y_ref.dtype)
    # BatchNorm batch statistics from the f32 accumulator (before downcast).
    # axis-0 reduce lands on the XLU (free slot); acc*acc is one VPU pass and
    # only matters if profiling shows VALU as the binding slot post-fusion.
    psum_ref[0] = jnp.sum(acc, axis=0, keepdims=True)
    pssq_ref[0] = jnp.sum(acc * acc, axis=0, keepdims=True)


def _bn_relu_kernel(y_ref, scale_ref, shift_ref, o_ref):
    """out = max(y * scale + shift, 0); per-channel scale/shift, f32 VPU math."""
    y = y_ref[...].astype(jnp.float32)
    o_ref[...] = jnp.maximum(y * scale_ref[...] + shift_ref[...], 0.0
                             ).astype(o_ref.dtype)


def conv_relu_forward(x_nchw, weight_oihw, bias, gamma, beta, *, ksize,
                      eps=1e-5, row_tile=None, compute_dtype=jnp.bfloat16):
    """Conv2d(pad=ksize//2) -> BatchNorm2d (training-mode batch stats) -> ReLU."""
    N, Cin, H, W = x_nchw.shape
    Cout = weight_oihw.shape[0]
    K = ksize
    p = K // 2
    KKCin = K * K * Cin
    Cpad = _round_up(Cout, _LANE)
    nbytes = jnp.dtype(compute_dtype).itemsize

    vmem_limit, tile_budget, target_rows = _device_budgets()

    # ---- glue (layout only): NCHW -> im2col rows (M, K*K*Cin), lane-dense ----
    x_nhwc = jnp.transpose(x_nchw, (0, 2, 3, 1)).astype(compute_dtype)
    xp = jnp.pad(x_nhwc, ((0, 0), (p, p), (p, p), (0, 0)))      # (N,H+2p,W+2p,Cin)
    taps = [xp[:, kh:kh + H, kw:kw + W, :] for kh in range(K) for kw in range(K)]
    x_cols = jnp.concatenate(taps, axis=-1).reshape(N * H * W, KKCin)

    m_total = N * H * W
    if row_tile is None:
        kkcin_lanes = _round_up(KKCin, _LANE)       # account for VMEM lane padding
        per_row = (2 * kkcin_lanes * nbytes         # x block, double-buffered
                   + 2 * Cpad * nbytes              # y block, double-buffered
                   + Cpad * 4)                      # f32 accumulator
        row_tile = _pick_row_tile(m_total, per_row, budget=tile_budget,
                                  target_rows=target_rows)
    tm = int(row_tile)
    m_pad = _round_up(m_total, tm)
    n_tiles = m_pad // tm
    if m_pad > m_total:                             # pad rows (corrected in stats)
        x_cols = jnp.pad(x_cols, ((0, m_pad - m_total), (0, 0)))

    # Conv weights as one (K*K*Cin, Cpad) GEMM RHS, lane-dense (128-padded) Cout.
    w2 = jnp.transpose(weight_oihw, (2, 3, 1, 0)).reshape(KKCin, Cout)
    w2 = jnp.pad(w2, ((0, 0), (0, Cpad - Cout))).astype(compute_dtype)
    b_f32 = jnp.pad(bias.astype(jnp.float32), (0, Cpad - Cout))
    b2d = b_f32.reshape(1, Cpad)

    # ---- Pallas pass 1: single GEMM per row tile + partial channel stats ----
    flops1 = int(2 * m_pad * KKCin * Cpad)
    bytes1 = int(m_pad * KKCin * nbytes + KKCin * Cpad * nbytes + Cpad * 4
                 + m_pad * Cpad * nbytes + 2 * n_tiles * Cpad * 4)
    y, psum, pssq = pl.pallas_call(
        _conv_stats_kernel,
        out_shape=(jax.ShapeDtypeStruct((m_pad, Cpad), compute_dtype),
                   jax.ShapeDtypeStruct((n_tiles, 1, Cpad), jnp.float32),
                   jax.ShapeDtypeStruct((n_tiles, 1, Cpad), jnp.float32)),
        grid=(n_tiles,),
        in_specs=[pl.BlockSpec((tm, KKCin), lambda i: (i, 0)),
                  pl.BlockSpec((KKCin, Cpad), lambda i: (0, 0)),
                  pl.BlockSpec((1, Cpad), lambda i: (0, 0))],
        out_specs=(pl.BlockSpec((tm, Cpad), lambda i: (i, 0)),
                   pl.BlockSpec((1, 1, Cpad), lambda i: (i, 0, 0)),
                   pl.BlockSpec((1, 1, Cpad), lambda i: (i, 0, 0))),
        compiler_params=pltpu.CompilerParams(
            dimension_semantics=("parallel",),
            vmem_limit_bytes=vmem_limit),
        cost_estimate=pl.CostEstimate(flops=flops1, transcendentals=0,
                                      bytes_accessed=bytes1),
    )(x_cols, w2, b2d)

    # ---- glue: finalize training-mode BatchNorm statistics (tiny, f32) ----
    # Zero-padded GEMM rows contribute exactly `bias` per channel (f32 exact);
    # subtract them so mean/var only cover the N*H*W real pixels.
    n_fill = m_pad - m_total
    csum = jnp.sum(psum[:, 0, :], axis=0) - n_fill * b_f32
    cssq = jnp.sum(pssq[:, 0, :], axis=0) - n_fill * b_f32 * b_f32
    count = jnp.float32(m_total)
    mean = csum / count
    # Biased variance (what torch BN uses for normalization); clamp guards the
    # E[x^2]-mean^2 cancellation. TODO(synk): Welford / centered accumulation
    # would be more robust for very large-mean activations.
    var = jnp.maximum(cssq / count - mean * mean, 0.0)
    gamma_p = jnp.pad(gamma.astype(jnp.float32), (0, Cpad - Cout),
                      constant_values=1.0)
    beta_p = jnp.pad(beta.astype(jnp.float32), (0, Cpad - Cout))
    scale = (gamma_p / jnp.sqrt(var + eps)).reshape(1, Cpad)
    shift = (beta_p - mean * scale[0]).reshape(1, Cpad)
    # TODO(synk): running_mean/running_var momentum buffer updates (training-time
    # side effect of nn.BatchNorm2d) are not materialized; output is unaffected.

    # ---- Pallas pass 2: fused normalize + ReLU on grouped (larger) tiles ----
    g = _pick_group(n_tiles, 4 * tm * Cpad * nbytes, budget=tile_budget)
    tm2 = tm * g
    n2 = n_tiles // g
    flops2 = int(3 * m_pad * Cpad)
    bytes2 = int(2 * m_pad * Cpad * nbytes + 2 * Cpad * 4)
    out = pl.pallas_call(
        _bn_relu_kernel,
        out_shape=jax.ShapeDtypeStruct((m_pad, Cpad), compute_dtype),
        grid=(n2,),
        in_specs=[pl.BlockSpec((tm2, Cpad), lambda i: (i, 0)),
                  pl.BlockSpec((1, Cpad), lambda i: (0, 0)),
                  pl.BlockSpec((1, Cpad), lambda i: (0, 0))],
        out_specs=pl.BlockSpec((tm2, Cpad), lambda i: (i, 0)),
        input_output_aliases={0: 0},
        compiler_params=pltpu.CompilerParams(
            dimension_semantics=("parallel",),
            vmem_limit_bytes=vmem_limit),
        cost_estimate=pl.CostEstimate(flops=flops2, transcendentals=0,
                                      bytes_accessed=bytes2),
    )(y, scale, shift)

    # ---- glue: drop row/channel padding BEFORE the transpose + f32 upcast ----
    out = out[:m_total, :Cout].reshape(N, H, W, Cout)
    return jnp.transpose(out, (0, 3, 1, 2)).astype(jnp.float32)


def _reference(x, w, b, gamma, beta, ksize, eps=1e-5):
    """Pure-JAX reference matching torch: Conv2d -> train-mode BN -> ReLU."""
    p = ksize // 2
    y = jax.lax.conv_general_dilated(
        x, w, window_strides=(1, 1), padding=((p, p), (p, p)),
        dimension_numbers=("NCHW", "OIHW", "NCHW"))
    y = y + b[None, :, None, None]
    mean = jnp.mean(y, axis=(0, 2, 3), keepdims=True)
    var = jnp.mean((y - mean) ** 2, axis=(0, 2, 3), keepdims=True)
    yh = (y - mean) / jnp.sqrt(var + eps)
    return jnp.maximum(yh * gamma[None, :, None, None] + beta[None, :, None, None],
                       0.0)


if __name__ == "__main__":
    key = jax.random.PRNGKey(0)
    kx, kw, kb = jax.random.split(key, 3)

    N, Cin, Cout, H, W, K = 2, 4, 8, 16, 16, 3

    x = jax.random.normal(kx, (N, Cin, H, W), jnp.float32)
    fan_in = Cin * K * K
    bound = 1.0 / (fan_in ** 0.5)
    weight = jax.random.uniform(kw, (Cout, Cin, K, K), jnp.float32, -bound, bound)
    bias = jax.random.uniform(kb, (Cout,), jnp.float32, -bound, bound)
    gamma = jnp.ones((Cout,), jnp.float32)   # torch BatchNorm2d defaults
    beta = jnp.zeros((Cout,), jnp.float32)

    ref = _reference(x, weight, bias, gamma, beta, K)

    # bf16 GEMM operands + bf16 intermediate, automatic row-tile selection.
    fwd_bf16 = jax.jit(functools.partial(conv_relu_forward, ksize=K,
                                         compute_dtype=jnp.bfloat16))
    out_bf16 = jax.block_until_ready(fwd_bf16(x, weight, bias, gamma, beta))
    assert out_bf16.shape == (N, Cout, H, W)
    if not jnp.allclose(out_bf16, ref, atol=5e-2, rtol=5e-2):
        raise AssertionError("Pallas ConvReLU (bf16) mismatch vs JAX reference")

    # f32 path with an explicit row_tile that does NOT divide N*H*W, exercising
    # the padded-row path and the exact BN-statistics correction.
    fwd_f32 = jax.jit(functools.partial(conv_relu_forward, ksize=K, row_tile=96,
                                        compute_dtype=jnp.float32))
    out_f32 = jax.block_until_ready(fwd_f32(x, weight, bias, gamma, beta))
    if not jnp.allclose(out_f32, ref, atol=2e-2, rtol=2e-2):
        raise AssertionError("Pallas ConvReLU (f32) mismatch vs JAX reference")

    print("KERNEL_OK")
</pallas_src>

<mosaic_0001>
module attributes {stable_mosaic.version = 11 : i64} {
  func.func @_conv_stats_kernel(%arg0: i32, %arg1: memref<256x36xbf16, #tpu.memory_space<vmem>>, %arg2: memref<36x128xbf16, #tpu.memory_space<vmem>>, %arg3: memref<1x128xf32, #tpu.memory_space<vmem>>, %arg4: memref<256x128xbf16, #tpu.memory_space<vmem>>, %arg5: memref<1x1x128xf32, #tpu.memory_space<vmem>>, %arg6: memref<1x1x128xf32, #tpu.memory_space<vmem>>) attributes {dimension_semantics = [#tpu.dimension_semantics<parallel>], iteration_bounds = array<i64: 2>, scalar_prefetch = 0 : i64, scratch_operands = 0 : i64, tpu.core_type = #tpu.core_type<tc>, window_params = [{transform_indices = @transform_0, window_bounds = array<i64: 256, 36>}, {pipeline_mode = #tpu.pipeline_mode<synchronous>, transform_indices = @transform_1, window_bounds = array<i64: 36, 128>}, {pipeline_mode = #tpu.pipeline_mode<synchronous>, transform_indices = @transform_2, window_bounds = array<i64: 1, 128>}, {transform_indices = @transform_3, window_bounds = array<i64: 256, 128>}, {transform_indices = @transform_4, window_bounds = array<i64: 1, 1, 128>}, {transform_indices = @transform_5, window_bounds = array<i64: 1, 1, 128>}]} {
    %c0 = arith.constant 0 : index
    %c0_0 = arith.constant 0 : index
    %0 = vector.load %arg1[%c0, %c0_0] : memref<256x36xbf16, #tpu.memory_space<vmem>>, vector<256x36xbf16>
    %c0_1 = arith.constant 0 : index
    %c0_2 = arith.constant 0 : index
    %1 = vector.load %arg2[%c0_1, %c0_2] : memref<36x128xbf16, #tpu.memory_space<vmem>>, vector<36x128xbf16>
    %cst = arith.constant dense<0.000000e+00> : vector<256x128xf32>
    %2 = tpu.matmul %0, %1, %cst {dimension_numbers = #tpu.dot_dimension_numbers<[1], [0], [0], [1], [0, 0, 1, 1], [], []>} : vector<256x36xbf16>, vector<36x128xbf16>, vector<256x128xf32> -> vector<256x128xf32>
    %c0_3 = arith.constant 0 : index
    %c0_4 = arith.constant 0 : index
    %3 = vector.load %arg3[%c0_3, %c0_4] : memref<1x128xf32, #tpu.memory_space<vmem>>, vector<1x128xf32>
    %4 = vector.broadcast %3 : vector<1x128xf32> to vector<256x128xf32>
    %5 = arith.addf %2, %4 : vector<256x128xf32>
    %6 = arith.truncf %5 : vector<256x128xf32> to vector<256x128xbf16>
    %c0_5 = arith.constant 0 : index
    %c0_6 = arith.constant 0 : index
    %7 = vector.load %arg4[%c0_5, %c0_6] : memref<256x128xbf16, #tpu.memory_space<vmem>>, vector<256x128xbf16>
    tpu.vector_store %arg4[%c0_5, %c0_6], %6 {strides = array<i32>} : memref<256x128xbf16, #tpu.memory_space<vmem>>, vector<256x128xbf16>,
    %cst_7 = arith.constant dense<0.000000e+00> : vector<128xf32>
    %8 = vector.multi_reduction <add>, %5, %cst_7 [0] : vector<256x128xf32> to vector<128xf32>
    %9 = vector.shape_cast %8 : vector<128xf32> to vector<1x128xf32>
    %c0_8 = arith.constant 0 : index
    %c0_9 = arith.constant 0 : index
    %c0_10 = arith.constant 0 : index
    %10 = vector.load %arg5[%c0_8, %c0_9, %c0_10] : memref<1x1x128xf32, #tpu.memory_space<vmem>>, vector<1x1x128xf32>
    %11 = vector.shape_cast %10 : vector<1x1x128xf32> to vector<1x128xf32>
    %12 = vector.shape_cast %9 : vector<1x128xf32> to vector<1x1x128xf32>
    tpu.vector_store %arg5[%c0_8, %c0_9, %c0_10], %12 {strides = array<i32>} : memref<1x1x128xf32, #tpu.memory_space<vmem>>, vector<1x1x128xf32>,
    %13 = arith.mulf %5, %5 : vector<256x128xf32>
    %cst_11 = arith.constant dense<0.000000e+00> : vector<128xf32>
    %14 = vector.multi_reduction <add>, %13, %cst_11 [0] : vector<256x128xf32> to vector<128xf32>
    %15 = vector.shape_cast %14 : vector<128xf32> to vector<1x128xf32>
    %c0_12 = arith.constant 0 : index
    %c0_13 = arith.constant 0 : index
    %c0_14 = arith.constant 0 : index
    %16 = vector.load %arg6[%c0_12, %c0_13, %c0_14] : memref<1x1x128xf32, #tpu.memory_space<vmem>>, vector<1x1x128xf32>
    %17 = vector.shape_cast %16 : vector<1x1x128xf32> to vector<1x128xf32>
    %18 = vector.shape_cast %15 : vector<1x128xf32> to vector<1x1x128xf32>
    tpu.vector_store %arg6[%c0_12, %c0_13, %c0_14], %18 {strides = array<i32>} : memref<1x1x128xf32, #tpu.memory_space<vmem>>, vector<1x1x128xf32>,
    return
  }
  func.func @transform_0(%arg0: i32) -> (i32, i32) {
    %c0_i32 = arith.constant 0 : i32
    %c0_i32_0 = arith.constant 0 : i32
    return %arg0, %c0_i32 : i32, i32
  }
  func.func @transform_1(%arg0: i32) -> (i32, i32) {
    %c0_i32 = arith.constant 0 : i32
    %c0_i32_0 = arith.constant 0 : i32
    %c0_i32_1 = arith.constant 0 : i32
    return %c0_i32, %c0_i32_0 : i32, i32
  }
  func.func @transform_2(%arg0: i32) -> (i32, i32) {
    %c0_i32 = arith.constant 0 : i32
    %c0_i32_0 = arith.constant 0 : i32
    %c0_i32_1 = arith.constant 0 : i32
    return %c0_i32, %c0_i32_0 : i32, i32
  }
  func.func @transform_3(%arg0: i32) -> (i32, i32) {
    %c0_i32 = arith.constant 0 : i32
    %c0_i32_0 = arith.constant 0 : i32
    return %arg0, %c0_i32 : i32, i32
  }
  func.func @transform_4(%arg0: i32) -> (i32, i32, i32) {
    %c0_i32 = arith.constant 0 : i32
    %c0_i32_0 = arith.constant 0 : i32
    %c0_i32_1 = arith.constant 0 : i32
    return %arg0, %c0_i32, %c0_i32_0 : i32, i32, i32
  }
  func.func @transform_5(%arg0: i32) -> (i32, i32, i32) {
    %c0_i32 = arith.constant 0 : i32
    %c0_i32_0 = arith.constant 0 : i32
    %c0_i32_1 = arith.constant 0 : i32
    return %arg0, %c0_i32, %c0_i32_0 : i32, i32, i32
  }
}

module attributes {stable_mosaic.version = 11 : i64} {
  func.func @_bn_relu_kernel(%arg0: i32, %arg1: memref<256x128xbf16, #tpu.memory_space<vmem>>, %arg2: memref<1x128xf32, #tpu.memory_space<vmem>>, %arg3: memref<1x128xf32, #tpu.memory_space<vmem>>, %arg4: memref<256x128xbf16, #tpu.memory_space<vmem>>) attributes {dimension_semantics = [#tpu.dimension_semantics<parallel>], iteration_bounds = array<i64: 2>, scalar_prefetch = 0 : i64, scratch_operands = 0 : i64, tpu.core_type = #tpu.core_type<tc>, window_params = [{transform_indices = @transform_0, window_bounds = array<i64: 256, 128>}, {pipeline_mode = #tpu.pipeline_mode<synchronous>, transform_indices = @transform_1, window_bounds = array<i64: 1, 128>}, {pipeline_mode = #tpu.pipeline_mode<synchronous>, transform_indices = @transform_2, window_bounds = array<i64: 1, 128>}, {transform_indices = @transform_3, window_bounds = array<i64: 256, 128>}]} {
    %c0 = arith.constant 0 : index
    %c0_0 = arith.constant 0 : index
    %0 = vector.load %arg1[%c0, %c0_0] : memref<256x128xbf16, #tpu.memory_space<vmem>>, vector<256x128xbf16>
    %1 = arith.extf %0 : vector<256x128xbf16> to vector<256x128xf32>
    %c0_1 = arith.constant 0 : index
    %c0_2 = arith.constant 0 : index
    %2 = vector.load %arg2[%c0_1, %c0_2] : memref<1x128xf32, #tpu.memory_space<vmem>>, vector<1x128xf32>
    %3 = vector.broadcast %2 : vector<1x128xf32> to vector<256x128xf32>
    %4 = arith.mulf %1, %3 : vector<256x128xf32>
    %c0_3 = arith.constant 0 : index
    %c0_4 = arith.constant 0 : index
    %5 = vector.load %arg3[%c0_3, %c0_4] : memref<1x128xf32, #tpu.memory_space<vmem>>, vector<1x128xf32>
    %6 = vector.broadcast %5 : vector<1x128xf32> to vector<256x128xf32>
    %7 = arith.addf %4, %6 : vector<256x128xf32>
    %cst = arith.constant 0.000000e+00 : f32
    %8 = vector.broadcast %cst : f32 to vector<256x128xf32>
    %9 = arith.maximumf %7, %8 : vector<256x128xf32>
    %10 = arith.truncf %9 : vector<256x128xf32> to vector<256x128xbf16>
    %c0_5 = arith.constant 0 : index
    %c0_6 = arith.constant 0 : index
    %11 = vector.load %arg4[%c0_5, %c0_6] : memref<256x128xbf16, #tpu.memory_space<vmem>>, vector<256x128xbf16>
    tpu.vector_store %arg4[%c0_5, %c0_6], %10 {strides = array<i32>} : memref<256x128xbf16, #tpu.memory_space<vmem>>, vector<256x128xbf16>,
    return
  }
  func.func @transform_0(%arg0: i32) -> (i32, i32) {
    %c0_i32 = arith.constant 0 : i32
    %c0_i32_0 = arith.constant 0 : i32
    return %arg0, %c0_i32 : i32, i32
  }
  func.func @transform_1(%arg0: i32) -> (i32, i32) {
    %c0_i32 = arith.constant 0 : i32
    %c0_i32_0 = arith.constant 0 : i32
    %c0_i32_1 = arith.constant 0 : i32
    return %c0_i32, %c0_i32_0 : i32, i32
  }
  func.func @transform_2(%arg0: i32) -> (i32, i32) {
    %c0_i32 = arith.constant 0 : i32
    %c0_i32_0 = arith.constant 0 : i32
    %c0_i32_1 = arith.constant 0 : i32
    return %c0_i32, %c0_i32_0 : i32, i32
  }
  func.func @transform_3(%arg0: i32) -> (i32, i32) {
    %c0_i32 = arith.constant 0 : i32
    %c0_i32_0 = arith.constant 0 : i32
    return %arg0, %c0_i32 : i32, i32
  }
}

</mosaic_0001>

<llo_original>
// kernel: conv_relu_forward.3
$region0: #{conv_relu_forward.3}
  #allocation0 [shape = 'u32[]', space=smem, size = 0x4, offset = 0x4, fixed_abs, tag = 'smem constant byte address 0x4 - core index']
  #allocation1 [shape = 'u32[72,128]{1,0:T(1,128)}', space=vmem, size = 0x9000, scoped, tag = 'internal scratch']
  %s0 = inlined_call_operand.vmem [shape: bf16[512,128], index: 0, kind: input, shape index: {}, may-alias: {0,3}]
  %s1 = inlined_call_operand.vmem [shape: f32[1,128], index: 1, kind: input, shape index: {}]
  %s2 = inlined_call_operand.vmem [shape: f32[1,128], index: 2, kind: input, shape index: {}]
  %s3 = inlined_call_operand.vmem [shape: bf16[512,128], index: 3, kind: output, shape index: {}, may-alias: {0,3}]
  %s4 = sld [smem:[#allocation0]]
  $region45: #{conv_relu_forward.3} parent=0
    _
  %s6 = ssub.s32 1, %s4
  %s7 = scalar_select 0, %s6, %s4
  loop: start=0, step=1, limit=4
  $region2: #{conv_relu_forward.3} parent=0 // loop_pre_header
    _
  $region3: #{conv_relu_forward.3} parent=0 // loop_header
    %s9 = sphi 0, %s13
    %p10 = scmp.ge.s32.totalorder %s9, 4
    %s19 = sphi 0, %s21
    %s22 = sphi 0, %s19
    %s23 = sphi 0, %s22
    %s39 = sphi 0, %s23
    %s43 = sphi 0, %s43
    %s45 = sphi 0, %s43
    %s46 = sphi 0, %s45
    %s60 = sphi 0, %s46
    %s64 = sphi 0, %s64
    %s66 = sphi 0, %s64
    %s67 = sphi 0, %s66
    %s81 = sphi 0, %s67
    %s87 = sphi 0, %s89
    %s90 = sphi 0, %s87
    %s91 = sphi 0, %s90
    %s107 = sphi 0, %s91
  $region4: #{conv_relu_forward.3} parent=0 // loop_header_branch
    %12 = sbr.rel (%p10) target = $region8
  $region5: #{conv_relu_forward.3} parent=0 // loop_body
    %s14 = ssub.s32 %s9, 1
    %s15 = ssub.s32 %s9, 2
    %s16 = sadd.s32 %s9, 1
    %s17 = ssub.s32 %s9, %s16
    %p18 = scmp.eq.s32.totalorder %s17, 0
    %s20 = sadd.s32 %s19, 1
    %s21 = scalar_select %p18, %s19, %s20
    %p24 = pneg %p18
    %p25 = scmp.eq.s32.totalorder %s9, 1
    %p26 = por %p24, %p25
    %p27 = scmp.ne.s32.totalorder %s19, %s22
    %p28 = scmp.eq.s32.totalorder %s9, 0
    %p29 = por %p27, %p28
    %p30 = scmp.ne.s32.totalorder %s19, %s22
    %p31 = scmp.eq.s32.totalorder %s14, 1
    %p32 = por %p30, %p31
    %p33 = scmp.ne.s32.totalorder %s22, %s23
    %p34 = scmp.eq.s32.totalorder %s14, 0
    %p35 = por %p33, %p34
    %p36 = scmp.ne.s32.totalorder %s22, %s23
    %p37 = scmp.eq.s32.totalorder %s15, 1
    %p38 = por %p36, %p37
    %p40 = scmp.ne.s32.totalorder %s23, %s39
    %p41 = scmp.eq.s32.totalorder %s15, 0
    %p42 = por %p40, %p41
    %s44 = sadd.s32 %s43, 1
    %p47 = scmp.eq.s32.totalorder %s9, 1
    %p48 = scmp.ne.s32.totalorder %s43, %s45
    %p49 = scmp.eq.s32.totalorder %s9, 0
    %p50 = por %p48, %p49
    %p51 = scmp.ne.s32.totalorder %s43, %s45
    %p52 = scmp.eq.s32.totalorder %s14, 1
    %p53 = por %p51, %p52
    %p54 = scmp.ne.s32.totalorder %s45, %s46
    %p55 = scmp.eq.s32.totalorder %s14, 0
    %p56 = por %p54, %p55
    %p57 = scmp.ne.s32.totalorder %s45, %s46
    %p58 = scmp.eq.s32.totalorder %s15, 1
    %p59 = por %p57, %p58
    %p61 = scmp.ne.s32.totalorder %s46, %s60
    %p62 = scmp.eq.s32.totalorder %s15, 0
    %p63 = por %p61, %p62
    %s65 = sadd.s32 %s64, 1
    %p68 = scmp.eq.s32.totalorder %s9, 1
    %p69 = scmp.ne.s32.totalorder %s64, %s66
    %p70 = scmp.eq.s32.totalorder %s9, 0
    %p71 = por %p69, %p70
    %p72 = scmp.ne.s32.totalorder %s64, %s66
    %p73 = scmp.eq.s32.totalorder %s14, 1
    %p74 = por %p72, %p73
    %p75 = scmp.ne.s32.totalorder %s66, %s67
    %p76 = scmp.eq.s32.totalorder %s14, 0
    %p77 = por %p75, %p76
    %p78 = scmp.ne.s32.totalorder %s66, %s67
    %p79 = scmp.eq.s32.totalorder %s15, 1
    %p80 = por %p78, %p79
    %p82 = scmp.ne.s32.totalorder %s67, %s81
    %p83 = scmp.eq.s32.totalorder %s15, 0
    %p84 = por %p82, %p83
    %s85 = ssub.s32 %s9, %s16
    %p86 = scmp.eq.s32.totalorder %s85, 0
    %s88 = sadd.s32 %s87, 1
    %s89 = scalar_select %p86, %s87, %s88
    %p92 = pneg %p86
    %p93 = scmp.eq.s32.totalorder %s9, 1
    %p94 = por %p92, %p93
    %p95 = scmp.ne.s32.totalorder %s87, %s90
    %p96 = scmp.eq.s32.totalorder %s9, 0
    %p97 = por %p95, %p96
    %p98 = scmp.ne.s32.totalorder %s87, %s90
    %p99 = scmp.eq.s32.totalorder %s14, 1
    %p100 = por %p98, %p99
    %p101 = scmp.ne.s32.totalorder %s90, %s91
    %p102 = scmp.eq.s32.totalorder %s14, 0
    %p103 = por %p101, %p102
    %p104 = scmp.ne.s32.totalorder %s90, %s91
    %p105 = scmp.eq.s32.totalorder %s15, 1
    %p106 = por %p104, %p105
    %p108 = scmp.ne.s32.totalorder %s91, %s107
    %p109 = scmp.eq.s32.totalorder %s15, 0
    %p110 = por %p108, %p109
    %p111 = scmp.le.s32.totalorder 1, %s9
    %p112 = scmp.lt.s32.totalorder %s9, 3
    %p113 = pnand %p111, %p112
    %p114 = pneg %p113
    // Predicated region
    $region9: #{conv_relu_forward.3} parent=5 // pred_check
      _
    $region10: #{conv_relu_forward.3} parent=5 // pred_check_branch
      %116 = sbr.rel (%p113) target = $region12
    $region11: #{conv_relu_forward.3} parent=5 // pred_region
      %s117 = ssub.s32 %s9, 1
      // Predicated region
      $region13: #{conv_relu_forward.3} parent=11 // pred_check
        %p118 = pneg %p56
      $region14: #{conv_relu_forward.3} parent=11 // pred_check_branch
        %120 = sbr.rel (%p118) target = $region16
      $region15: #{conv_relu_forward.3} parent=11 // pred_region
        _
      $region16: #{conv_relu_forward.3} parent=11 // pred_fallthru
        _
      // Predicated region
      $region17: #{conv_relu_forward.3} parent=11 // pred_check
        %p121 = pneg %p77
      $region18: #{conv_relu_forward.3} parent=11 // pred_check_branch
        %123 = sbr.rel (%p121) target = $region20
      $region19: #{conv_relu_forward.3} parent=11 // pred_region
        _
      $region20: #{conv_relu_forward.3} parent=11 // pred_fallthru
        _
    $region12: #{conv_relu_forward.3} parent=5 // pred_fallthru
      _
    %p124 = scmp.lt.s32.totalorder %s9, 2
    // Predicated region
    $region21: #{conv_relu_forward.3} parent=5 // pred_check
      %p125 = pneg %p124
    $region22: #{conv_relu_forward.3} parent=5 // pred_check_branch
      %127 = sbr.rel (%p125) target = $region24
    $region23: #{conv_relu_forward.3} parent=5 // pred_region
      // Predicated region
      $region25: #{conv_relu_forward.3} parent=23 // pred_check
        %p128 = pneg %p29
      $region26: #{conv_relu_forward.3} parent=23 // pred_check_branch
        %130 = sbr.rel (%p128) target = $region28
      $region27: #{conv_relu_forward.3} parent=23 // pred_region
        %s131 = smul.u32 32, %s9
        %p132 = scmp.lt.s32.totalorder %s131, 63
        %s133 = scalar_select %p132, %s131, 63
        %s134 = smul.addr %s133, 4
        %s135 = scalar_lea.vmem %s0, %s134
        %s136 = smul.u32 32, %s9
      $region28: #{conv_relu_forward.3} parent=23 // pred_fallthru
        _
    $region24: #{conv_relu_forward.3} parent=5 // pred_fallthru
      _
    %p137 = scmp.le.s32.totalorder 1, %s9
    %p138 = scmp.lt.s32.totalorder %s9, 3
    %p139 = pnand %p137, %p138
    %p140 = pneg %p139
    // Predicated region
    $region29: #{conv_relu_forward.3} parent=5 // pred_check
      _
    $region30: #{conv_relu_forward.3} parent=5 // pred_check_branch
      %142 = sbr.rel (%p139) target = $region32
    $region31: #{conv_relu_forward.3} parent=5 // pred_region
      %s143 = ssub.s32 %s9, 1
      %s144 = smul.u32 32, %s14
      %p145 = scmp.lt.s32.totalorder %s144, 63
      %s146 = scalar_select %p145, %s144, 63
      %s147 = smul.addr %s146, 4
      %s148 = scalar_lea.vmem %s0, %s147
      %p149 = pneg %p35
      %p150 = pneg %p32
      %p151 = pneg %p56
      %p152 = pneg %p53
      %p153 = pneg %p77
      %p154 = pneg %p74
      %p155 = pneg %p103
      %p156 = pneg %p100
      %s157 = smul.u32 32, %s14
      %p158 = scmp.lt.s32.totalorder %s157, 63
      %s159 = scalar_select %p158, %s157, 63
      %s160 = smul.addr %s159, 4
      %s161 = scalar_lea.vmem %s3, %s160
      %s162 = smul.u32 32, %s14
      %p163 = scmp.lt.s32.totalorder %s162, 63
      %s164 = scalar_select %p163, %s162, 63
      %s165 = smul.addr %s164, 4
      %s166 = scalar_lea.vmem %s0, %s165
      %s167 = smul.u32 32, %s14
      %s168 = smul.u32 32, %s14
      %p169 = scmp.lt.s32.totalorder %s168, 63
      %s170 = scalar_select %p169, %s168, 63
      %s171 = smul.addr %s170, 4
      %s172 = scalar_lea.vmem %s3, %s171
      %s173 = smul.u32 32, %s14
      %v174 = vld [vmem:[%s166] sm:$0xf]
      %v175 = vld [vmem:[%s166 + $0x4] sm:$0xf]
      %v176 = vld [vmem:[%s166 + $0x8] sm:$0xf]
      %v177 = vld [vmem:[%s166 + $0xc] sm:$0xf]
      %v178 = vld [vmem:[%s166 + $0x10] sm:$0xf]
      %v179 = vld [vmem:[%s166 + $0x14] sm:$0xf]
      %v180 = vld [vmem:[%s166 + $0x18] sm:$0xf]
      %v181 = vld [vmem:[%s166 + $0x1c] sm:$0xf]
      %v182 = vld [vmem:[%s166 + $0x20] sm:$0xf]
      %v183 = vld [vmem:[%s166 + $0x24] sm:$0xf]
      %v184 = vld [vmem:[%s166 + $0x28] sm:$0xf]
      %v185 = vld [vmem:[%s166 + $0x2c] sm:$0xf]
      %v186 = vld [vmem:[%s166 + $0x30] sm:$0xf]
      %v187 = vld [vmem:[%s166 + $0x34] sm:$0xf]
      %v188 = vld [vmem:[%s166 + $0x38] sm:$0xf]
      %v189 = vld [vmem:[%s166 + $0x3c] sm:$0xf]
      %v190 = vld [vmem:[%s166 + $0x40] sm:$0xf]
      %v191 = vld [vmem:[%s166 + $0x44] sm:$0xf]
      %v192 = vld [vmem:[%s166 + $0x48] sm:$0xf]
      %v193 = vld [vmem:[%s166 + $0x4c] sm:$0xf]
      %v194 = vld [vmem:[%s166 + $0x50] sm:$0xf]
      %v195 = vld [vmem:[%s166 + $0x54] sm:$0xf]
      %v196 = vld [vmem:[%s166 + $0x58] sm:$0xf]
      %v197 = vld [vmem:[%s166 + $0x5c] sm:$0xf]
      %v198 = vld [vmem:[%s166 + $0x60] sm:$0xf]
      %v199 = vld [vmem:[%s166 + $0x64] sm:$0xf]
      %v200 = vld [vmem:[%s166 + $0x68] sm:$0xf]
      %v201 = vld [vmem:[%s166 + $0x6c] sm:$0xf]
      %v202 = vld [vmem:[%s166 + $0x70] sm:$0xf]
      %v203 = vld [vmem:[%s166 + $0x74] sm:$0xf]
      %v204 = vld [vmem:[%s166 + $0x78] sm:$0xf]
      %v205 = vld [vmem:[%s166 + $0x7c] sm:$0xf]
      %v206 = vunpack.c.l.bf16 %v174
      %v207 = vunpack.c.l.bf16 %v175
      %v208 = vunpack.c.l.bf16 %v176
      %v209 = vunpack.c.l.bf16 %v177
      %v210 = vunpack.c.l.bf16 %v178
      %v211 = vunpack.c.l.bf16 %v179
      %v212 = vunpack.c.l.bf16 %v180
      %v213 = vunpack.c.l.bf16 %v181
      %v214 = vunpack.c.l.bf16 %v182
      %v215 = vunpack.c.l.bf16 %v183
      %v216 = vunpack.c.l.bf16 %v184
      %v217 = vunpack.c.l.bf16 %v185
      %v218 = vunpack.c.l.bf16 %v186
      %v219 = vunpack.c.l.bf16 %v187
      %v220 = vunpack.c.l.bf16 %v188
      %v221 = vunpack.c.l.bf16 %v189
      %v222 = vunpack.c.l.bf16 %v190
      %v223 = vunpack.c.l.bf16 %v191
      %v224 = vunpack.c.l.bf16 %v192
      %v225 = vunpack.c.l.bf16 %v193
      %v226 = vunpack.c.l.bf16 %v194
      %v227 = vunpack.c.l.bf16 %v195
      %v228 = vunpack.c.l.bf16 %v196
      %v229 = vunpack.c.l.bf16 %v197
      %v230 = vunpack.c.l.bf16 %v198
      %v231 = vunpack.c.l.bf16 %v199
      %v232 = vunpack.c.l.bf16 %v200
      %v233 = vunpack.c.l.bf16 %v201
      %v234 = vunpack.c.l.bf16 %v202
      %v235 = vunpack.c.l.bf16 %v203
      %v236 = vunpack.c.l.bf16 %v204
      %v237 = vunpack.c.l.bf16 %v205
      %v238 = vld [vmem:[%s1] sm:$0x1]
      %v240 = vperm.slane %v238, 0
      %v242 = vmul.f32 %v206, %v240
      %v243 = vmul.f32 %v207, %v240
      %v244 = vmul.f32 %v208, %v240
      %v245 = vmul.f32 %v209, %v240
      %v246 = vmul.f32 %v210, %v240
      %v247 = vmul.f32 %v211, %v240
      %v248 = vmul.f32 %v212, %v240
      %v249 = vmul.f32 %v213, %v240
      %v250 = vmul.f32 %v214, %v240
      %v251 = vmul.f32 %v215, %v240
      %v252 = vmul.f32 %v216, %v240
      %v253 = vmul.f32 %v217, %v240
      %v254 = vmul.f32 %v218, %v240
      %v255 = vmul.f32 %v219, %v240
      %v256 = vmul.f32 %v220, %v240
      %v257 = vmul.f32 %v221, %v240
      %v258 = vmul.f32 %v222, %v240
      %v259 = vmul.f32 %v223, %v240
      %v260 = vmul.f32 %v224, %v240
      %v261 = vmul.f32 %v225, %v240
      %v262 = vmul.f32 %v226, %v240
      %v263 = vmul.f32 %v227, %v240
      %v264 = vmul.f32 %v228, %v240
      %v265 = vmul.f32 %v229, %v240
      %v266 = vmul.f32 %v230, %v240
      %v267 = vmul.f32 %v231, %v240
      %v268 = vmul.f32 %v232, %v240
      %v269 = vmul.f32 %v233, %v240
      %v270 = vmul.f32 %v234, %v240
      %v271 = vmul.f32 %v235, %v240
      %v272 = vmul.f32 %v236, %v240
      %v273 = vmul.f32 %v237, %v240
      %v274 = vld [vmem:[%s2] sm:$0x1]
      %v276 = vperm.slane %v274, 0
      %v278 = vadd.f32 %v242, %v276
      %v279 = vadd.f32 %v243, %v276
      %v280 = vadd.f32 %v244, %v276
      %v281 = vadd.f32 %v245, %v276
      %v282 = vadd.f32 %v246, %v276
      %v283 = vadd.f32 %v247, %v276
      %v284 = vadd.f32 %v248, %v276
      %v285 = vadd.f32 %v249, %v276
      %v286 = vadd.f32 %v250, %v276
      %v287 = vadd.f32 %v251, %v276
      %v288 = vadd.f32 %v252, %v276
      %v289 = vadd.f32 %v253, %v276
      %v290 = vadd.f32 %v254, %v276
      %v291 = vadd.f32 %v255, %v276
      %v292 = vadd.f32 %v256, %v276
      %v293 = vadd.f32 %v257, %v276
      %v294 = vadd.f32 %v258, %v276
      %v295 = vadd.f32 %v259, %v276
      %v296 = vadd.f32 %v260, %v276
      %v297 = vadd.f32 %v261, %v276
      %v298 = vadd.f32 %v262, %v276
      %v299 = vadd.f32 %v263, %v276
      %v300 = vadd.f32 %v264, %v276
      %v301 = vadd.f32 %v265, %v276
      %v302 = vadd.f32 %v266, %v276
      %v303 = vadd.f32 %v267, %v276
      %v304 = vadd.f32 %v268, %v276
      %v305 = vadd.f32 %v269, %v276
      %v306 = vadd.f32 %v270, %v276
      %v307 = vadd.f32 %v271, %v276
      %v308 = vadd.f32 %v272, %v276
      %v309 = vadd.f32 %v273, %v276
      %v310 = vmax.f32 %v278, 0.0
      %v311 = vmax.f32 %v279, 0.0
      %v312 = vmax.f32 %v280, 0.0
      %v313 = vmax.f32 %v281, 0.0
      %v314 = vmax.f32 %v282, 0.0
      %v315 = vmax.f32 %v283, 0.0
      %v316 = vmax.f32 %v284, 0.0
      %v317 = vmax.f32 %v285, 0.0
      %v318 = vmax.f32 %v286, 0.0
      %v319 = vmax.f32 %v287, 0.0
      %v320 = vmax.f32 %v288, 0.0
      %v321 = vmax.f32 %v289, 0.0
      %v322 = vmax.f32 %v290, 0.0
      %v323 = vmax.f32 %v291, 0.0
      %v324 = vmax.f32 %v292, 0.0
      %v325 = vmax.f32 %v293, 0.0
      %v326 = vmax.f32 %v294, 0.0
      %v327 = vmax.f32 %v295, 0.0
      %v328 = vmax.f32 %v296, 0.0
      %v329 = vmax.f32 %v297, 0.0
      %v330 = vmax.f32 %v298, 0.0
      %v331 = vmax.f32 %v299, 0.0
      %v332 = vmax.f32 %v300, 0.0
      %v333 = vmax.f32 %v301, 0.0
      %v334 = vmax.f32 %v302, 0.0
      %v335 = vmax.f32 %v303, 0.0
      %v336 = vmax.f32 %v304, 0.0
      %v337 = vmax.f32 %v305, 0.0
      %v338 = vmax.f32 %v306, 0.0
      %v339 = vmax.f32 %v307, 0.0
      %v340 = vmax.f32 %v308, 0.0
      %v341 = vmax.f32 %v309, 0.0
      %v342 = vpack.c.bf16 %v310, %v310
      %v343 = vpack.c.bf16 %v311, %v311
      %v344 = vpack.c.bf16 %v312, %v312
      %v345 = vpack.c.bf16 %v313, %v313
      %v346 = vpack.c.bf16 %v314, %v314
      %v347 = vpack.c.bf16 %v315, %v315
      %v348 = vpack.c.bf16 %v316, %v316
      %v349 = vpack.c.bf16 %v317, %v317
      %v350 = vpack.c.bf16 %v318, %v318
      %v351 = vpack.c.bf16 %v319, %v319
      %v352 = vpack.c.bf16 %v320, %v320
      %v353 = vpack.c.bf16 %v321, %v321
      %v354 = vpack.c.bf16 %v322, %v322
      %v355 = vpack.c.bf16 %v323, %v323
      %v356 = vpack.c.bf16 %v324, %v324
      %v357 = vpack.c.bf16 %v325, %v325
      %v358 = vpack.c.bf16 %v326, %v326
      %v359 = vpack.c.bf16 %v327, %v327
      %v360 = vpack.c.bf16 %v328, %v328
      %v361 = vpack.c.bf16 %v329, %v329
      %v362 = vpack.c.bf16 %v330, %v330
      %v363 = vpack.c.bf16 %v331, %v331
      %v364 = vpack.c.bf16 %v332, %v332
      %v365 = vpack.c.bf16 %v333, %v333
      %v366 = vpack.c.bf16 %v334, %v334
      %v367 = vpack.c.bf16 %v335, %v335
      %v368 = vpack.c.bf16 %v336, %v336
      %v369 = vpack.c.bf16 %v337, %v337
      %v370 = vpack.c.bf16 %v338, %v338
      %v371 = vpack.c.bf16 %v339, %v339
      %v372 = vpack.c.bf16 %v340, %v340
      %v373 = vpack.c.bf16 %v341, %v341
      %374 = vst [vmem:[%s172] sm:$0xf] %v342
      %375 = vst [vmem:[%s172 + $0x4] sm:$0xf] %v343
      %376 = vst [vmem:[%s172 + $0x8] sm:$0xf] %v344
      %377 = vst [vmem:[%s172 + $0xc] sm:$0xf] %v345
      %378 = vst [vmem:[%s172 + $0x10] sm:$0xf] %v346
      %379 = vst [vmem:[%s172 + $0x14] sm:$0xf] %v347
      %380 = vst [vmem:[%s172 + $0x18] sm:$0xf] %v348
      %381 = vst [vmem:[%s172 + $0x1c] sm:$0xf] %v349
      %382 = vst [vmem:[%s172 + $0x20] sm:$0xf] %v350
      %383 = vst [vmem:[%s172 + $0x24] sm:$0xf] %v351
      %384 = vst [vmem:[%s172 + $0x28] sm:$0xf] %v352
      %385 = vst [vmem:[%s172 + $0x2c] sm:$0xf] %v353
      %386 = vst [vmem:[%s172 + $0x30] sm:$0xf] %v354
      %387 = vst [vmem:[%s172 + $0x34] sm:$0xf] %v355
      %388 = vst [vmem:[%s172 + $0x38] sm:$0xf] %v356
      %389 = vst [vmem:[%s172 + $0x3c] sm:$0xf] %v357
      %390 = vst [vmem:[%s172 + $0x40] sm:$0xf] %v358
      %391 = vst [vmem:[%s172 + $0x44] sm:$0xf] %v359
      %392 = vst [vmem:[%s172 + $0x48] sm:$0xf] %v360
      %393 = vst [vmem:[%s172 + $0x4c] sm:$0xf] %v361
      %394 = vst [vmem:[%s172 + $0x50] sm:$0xf] %v362
      %395 = vst [vmem:[%s172 + $0x54] sm:$0xf] %v363
      %396 = vst [vmem:[%s172 + $0x58] sm:$0xf] %v364
      %397 = vst [vmem:[%s172 + $0x5c] sm:$0xf] %v365
      %398 = vst [vmem:[%s172 + $0x60] sm:$0xf] %v366
      %399 = vst [vmem:[%s172 + $0x64] sm:$0xf] %v367
      %400 = vst [vmem:[%s172 + $0x68] sm:$0xf] %v368
      %401 = vst [vmem:[%s172 + $0x6c] sm:$0xf] %v369
      %402 = vst [vmem:[%s172 + $0x70] sm:$0xf] %v370
      %403 = vst [vmem:[%s172 + $0x74] sm:$0xf] %v371
      %404 = vst [vmem:[%s172 + $0x78] sm:$0xf] %v372
      %405 = vst [vmem:[%s172 + $0x7c] sm:$0xf] %v373
      %s406 = smul.u32 32, %s14
      %p407 = scmp.lt.s32.totalorder %s406, 63
      %s408 = scalar_select %p407, %s406, 63
      %s409 = smul.addr %s408, 4
      %s410 = scalar_lea.vmem %s3, %s409
      // Predicated region
      $region33: #{conv_relu_forward.3} parent=31 // pred_check
        %p411 = pneg %p100
      $region34: #{conv_relu_forward.3} parent=31 // pred_check_branch
        %413 = sbr.rel (%p411) target = $region36
      $region35: #{conv_relu_forward.3} parent=31 // pred_region
        %s414 = smul.u32 32, %s14
      $region36: #{conv_relu_forward.3} parent=31 // pred_fallthru
        _
    $region32: #{conv_relu_forward.3} parent=5 // pred_fallthru
      _
    %p415 = scmp.le.s32.totalorder 2, %s9
    // Predicated region
    $region37: #{conv_relu_forward.3} parent=5 // pred_check
      %p416 = pneg %p415
    $region38: #{conv_relu_forward.3} parent=5 // pred_check_branch
      %418 = sbr.rel (%p416) target = $region40
    $region39: #{conv_relu_forward.3} parent=5 // pred_region
      %s419 = ssub.s32 %s9, 2
      // Predicated region
      $region41: #{conv_relu_forward.3} parent=39 // pred_check
        %p420 = pneg %p106
      $region42: #{conv_relu_forward.3} parent=39 // pred_check_branch
        %422 = sbr.rel (%p420) target = $region44
      $region43: #{conv_relu_forward.3} parent=39 // pred_region
        %s423 = smul.u32 32, %s15
        %p424 = scmp.lt.s32.totalorder %s423, 63
        %s425 = scalar_select %p424, %s423, 63
        %s426 = smul.addr %s425, 4
        %s427 = scalar_lea.vmem %s3, %s426
      $region44: #{conv_relu_forward.3} parent=39 // pred_fallthru
        _
    $region40: #{conv_relu_forward.3} parent=5 // pred_fallthru
      _
  $region6: #{conv_relu_forward.3} parent=0 // loop_footer
    %s13 = sadd.s32 1, %s9
  $region7: #{conv_relu_forward.3} parent=0 // loop_footer_branch
    %8 = sbr.rel target = $region3
  $region8: #{conv_relu_forward.3} parent=0 // loop_exit
    _

// kernel: conv_relu_forward.2
$region0: #{conv_relu_forward.2}
  #allocation0 [shape = 'u32[]', space=smem, size = 0x4, offset = 0x4, fixed_abs, tag = 'smem constant byte address 0x4 - core index']
  #allocation1 [shape = 'u32[72,128]{1,0:T(1,128)}', space=vmem, size = 0x9000, scoped, tag = 'internal scratch']
  %s0 = inlined_call_operand.vmem [shape: bf16[512,36], index: 0, kind: input, shape index: {}]
  %s1 = inlined_call_operand.vmem [shape: bf16[36,128], index: 1, kind: input, shape index: {}]
  %s2 = inlined_call_operand.vmem [shape: f32[1,128], index: 2, kind: input, shape index: {}]
  %s3 = inlined_call_operand.vmem [shape: bf16[512,128], index: 3, kind: output, shape index: {0}]
  %s4 = inlined_call_operand.vmem [shape: f32[2,1,128], index: 4, kind: output, shape index: {1}]
  %s5 = inlined_call_operand.vmem [shape: f32[2,1,128], index: 5, kind: output, shape index: {2}]
  %6 = xla_tuple %s3, %s4, %s5
  %s7 = sld [smem:[#allocation0]]
  $region61: #{conv_relu_forward.2} parent=0
    _
  %s9 = ssub.s32 1, %s7
  %s10 = scalar_select 0, %s9, %s7
  loop: start=0, step=1, limit=4
  $region2: #{conv_relu_forward.2} parent=0 // loop_pre_header
    _
  $region3: #{conv_relu_forward.2} parent=0 // loop_header
    %s12 = sphi 0, %s16
    %p13 = scmp.ge.s32.totalorder %s12, 4
    %s22 = sphi 0, %s24
    %s25 = sphi 0, %s22
    %s26 = sphi 0, %s25
    %s42 = sphi 0, %s26
    %s46 = sphi 0, %s46
    %s48 = sphi 0, %s46
    %s49 = sphi 0, %s48
    %s63 = sphi 0, %s49
    %s67 = sphi 0, %s67
    %s69 = sphi 0, %s67
    %s70 = sphi 0, %s69
    %s84 = sphi 0, %s70
    %s90 = sphi 0, %s92
    %s93 = sphi 0, %s90
    %s94 = sphi 0, %s93
    %s110 = sphi 0, %s94
    %s116 = sphi 0, %s118
    %s119 = sphi 0, %s116
    %s120 = sphi 0, %s119
    %s136 = sphi 0, %s120
    %s142 = sphi 0, %s144
    %s145 = sphi 0, %s142
    %s146 = sphi 0, %s145
    %s162 = sphi 0, %s146
  $region4: #{conv_relu_forward.2} parent=0 // loop_header_branch
    %15 = sbr.rel (%p13) target = $region8
  $region5: #{conv_relu_forward.2} parent=0 // loop_body
    %s17 = ssub.s32 %s12, 1
    %s18 = ssub.s32 %s12, 2
    %s19 = sadd.s32 %s12, 1
    %s20 = ssub.s32 %s12, %s19
    %p21 = scmp.eq.s32.totalorder %s20, 0
    %s23 = sadd.s32 %s22, 1
    %s24 = scalar_select %p21, %s22, %s23
    %p27 = pneg %p21
    %p28 = scmp.eq.s32.totalorder %s12, 1
    %p29 = por %p27, %p28
    %p30 = scmp.ne.s32.totalorder %s22, %s25
    %p31 = scmp.eq.s32.totalorder %s12, 0
    %p32 = por %p30, %p31
    %p33 = scmp.ne.s32.totalorder %s22, %s25
    %p34 = scmp.eq.s32.totalorder %s17, 1
    %p35 = por %p33, %p34
    %p36 = scmp.ne.s32.totalorder %s25, %s26
    %p37 = scmp.eq.s32.totalorder %s17, 0
    %p38 = por %p36, %p37
    %p39 = scmp.ne.s32.totalorder %s25, %s26
    %p40 = scmp.eq.s32.totalorder %s18, 1
    %p41 = por %p39, %p40
    %p43 = scmp.ne.s32.totalorder %s26, %s42
    %p44 = scmp.eq.s32.totalorder %s18, 0
    %p45 = por %p43, %p44
    %s47 = sadd.s32 %s46, 1
    %p50 = scmp.eq.s32.totalorder %s12, 1
    %p51 = scmp.ne.s32.totalorder %s46, %s48
    %p52 = scmp.eq.s32.totalorder %s12, 0
    %p53 = por %p51, %p52
    %p54 = scmp.ne.s32.totalorder %s46, %s48
    %p55 = scmp.eq.s32.totalorder %s17, 1
    %p56 = por %p54, %p55
    %p57 = scmp.ne.s32.totalorder %s48, %s49
    %p58 = scmp.eq.s32.totalorder %s17, 0
    %p59 = por %p57, %p58
    %p60 = scmp.ne.s32.totalorder %s48, %s49
    %p61 = scmp.eq.s32.totalorder %s18, 1
    %p62 = por %p60, %p61
    %p64 = scmp.ne.s32.totalorder %s49, %s63
    %p65 = scmp.eq.s32.totalorder %s18, 0
    %p66 = por %p64, %p65
    %s68 = sadd.s32 %s67, 1
    %p71 = scmp.eq.s32.totalorder %s12, 1
    %p72 = scmp.ne.s32.totalorder %s67, %s69
    %p73 = scmp.eq.s32.totalorder %s12, 0
    %p74 = por %p72, %p73
    %p75 = scmp.ne.s32.totalorder %s67, %s69
    %p76 = scmp.eq.s32.totalorder %s17, 1
    %p77 = por %p75, %p76
    %p78 = scmp.ne.s32.totalorder %s69, %s70
    %p79 = scmp.eq.s32.totalorder %s17, 0
    %p80 = por %p78, %p79
    %p81 = scmp.ne.s32.totalorder %s69, %s70
    %p82 = scmp.eq.s32.totalorder %s18, 1
    %p83 = por %p81, %p82
    %p85 = scmp.ne.s32.totalorder %s70, %s84
    %p86 = scmp.eq.s32.totalorder %s18, 0
    %p87 = por %p85, %p86
    %s88 = ssub.s32 %s12, %s19
    %p89 = scmp.eq.s32.totalorder %s88, 0
    %s91 = sadd.s32 %s90, 1
    %s92 = scalar_select %p89, %s90, %s91
    %p95 = pneg %p89
    %p96 = scmp.eq.s32.totalorder %s12, 1
    %p97 = por %p95, %p96
    %p98 = scmp.ne.s32.totalorder %s90, %s93
    %p99 = scmp.eq.s32.totalorder %s12, 0
    %p100 = por %p98, %p99
    %p101 = scmp.ne.s32.totalorder %s90, %s93
    %p102 = scmp.eq.s32.totalorder %s17, 1
    %p103 = por %p101, %p102
    %p104 = scmp.ne.s32.totalorder %s93, %s94
    %p105 = scmp.eq.s32.totalorder %s17, 0
    %p106 = por %p104, %p105
    %p107 = scmp.ne.s32.totalorder %s93, %s94
    %p108 = scmp.eq.s32.totalorder %s18, 1
    %p109 = por %p107, %p108
    %p111 = scmp.ne.s32.totalorder %s94, %s110
    %p112 = scmp.eq.s32.totalorder %s18, 0
    %p113 = por %p111, %p112
    %s114 = ssub.s32 %s12, %s19
    %p115 = scmp.eq.s32.totalorder %s114, 0
    %s117 = sadd.s32 %s116, 1
    %s118 = scalar_select %p115, %s116, %s117
    %p121 = pneg %p115
    %p122 = scmp.eq.s32.totalorder %s12, 1
    %p123 = por %p121, %p122
    %p124 = scmp.ne.s32.totalorder %s116, %s119
    %p125 = scmp.eq.s32.totalorder %s12, 0
    %p126 = por %p124, %p125
    %p127 = scmp.ne.s32.totalorder %s116, %s119
    %p128 = scmp.eq.s32.totalorder %s17, 1
    %p129 = por %p127, %p128
    %p130 = scmp.ne.s32.totalorder %s119, %s120
    %p131 = scmp.eq.s32.totalorder %s17, 0
    %p132 = por %p130, %p131
    %p133 = scmp.ne.s32.totalorder %s119, %s120
    %p134 = scmp.eq.s32.totalorder %s18, 1
    %p135 = por %p133, %p134
    %p137 = scmp.ne.s32.totalorder %s120, %s136
    %p138 = scmp.eq.s32.totalorder %s18, 0
    %p139 = por %p137, %p138
    %s140 = ssub.s32 %s12, %s19
    %p141 = scmp.eq.s32.totalorder %s140, 0
    %s143 = sadd.s32 %s142, 1
    %s144 = scalar_select %p141, %s142, %s143
    %p147 = pneg %p141
    %p148 = scmp.eq.s32.totalorder %s12, 1
    %p149 = por %p147, %p148
    %p150 = scmp.ne.s32.totalorder %s142, %s145
    %p151 = scmp.eq.s32.totalorder %s12, 0
    %p152 = por %p150, %p151
    %p153 = scmp.ne.s32.totalorder %s142, %s145
    %p154 = scmp.eq.s32.totalorder %s17, 1
    %p155 = por %p153, %p154
    %p156 = scmp.ne.s32.totalorder %s145, %s146
    %p157 = scmp.eq.s32.totalorder %s17, 0
    %p158 = por %p156, %p157
    %p159 = scmp.ne.s32.totalorder %s145, %s146
    %p160 = scmp.eq.s32.totalorder %s18, 1
    %p161 = por %p159, %p160
    %p163 = scmp.ne.s32.totalorder %s146, %s162
    %p164 = scmp.eq.s32.totalorder %s18, 0
    %p165 = por %p163, %p164
    %p166 = scmp.le.s32.totalorder 1, %s12
    %p167 = scmp.lt.s32.totalorder %s12, 3
    %p168 = pnand %p166, %p167
    %p169 = pneg %p168
    // Predicated region
    $region9: #{conv_relu_forward.2} parent=5 // pred_check
      _
    $region10: #{conv_relu_forward.2} parent=5 // pred_check_branch
      %171 = sbr.rel (%p168) target = $region12
    $region11: #{conv_relu_forward.2} parent=5 // pred_region
      %s172 = ssub.s32 %s12, 1
      // Predicated region
      $region13: #{conv_relu_forward.2} parent=11 // pred_check
        %p173 = pneg %p59
      $region14: #{conv_relu_forward.2} parent=11 // pred_check_branch
        %175 = sbr.rel (%p173) target = $region16
      $region15: #{conv_relu_forward.2} parent=11 // pred_region
        _
      $region16: #{conv_relu_forward.2} parent=11 // pred_fallthru
        _
      // Predicated region
      $region17: #{conv_relu_forward.2} parent=11 // pred_check
        %p176 = pneg %p80
      $region18: #{conv_relu_forward.2} parent=11 // pred_check_branch
        %178 = sbr.rel (%p176) target = $region20
      $region19: #{conv_relu_forward.2} parent=11 // pred_region
        _
      $region20: #{conv_relu_forward.2} parent=11 // pred_fallthru
        _
    $region12: #{conv_relu_forward.2} parent=5 // pred_fallthru
      _
    %p179 = scmp.lt.s32.totalorder %s12, 2
    // Predicated region
    $region21: #{conv_relu_forward.2} parent=5 // pred_check
      %p180 = pneg %p179
    $region22: #{conv_relu_forward.2} parent=5 // pred_check_branch
      %182 = sbr.rel (%p180) target = $region24
    $region23: #{conv_relu_forward.2} parent=5 // pred_region
      // Predicated region
      $region25: #{conv_relu_forward.2} parent=23 // pred_check
        %p183 = pneg %p32
      $region26: #{conv_relu_forward.2} parent=23 // pred_check_branch
        %185 = sbr.rel (%p183) target = $region28
      $region27: #{conv_relu_forward.2} parent=23 // pred_region
        %s186 = smul.u32 32, %s12
        %p187 = scmp.lt.s32.totalorder %s186, 63
        %s188 = scalar_select %p187, %s186, 63
        %s189 = smul.addr %s188, 4
        %s190 = scalar_lea.vmem %s0, %s189
        %s191 = smul.u32 32, %s12
      $region28: #{conv_relu_forward.2} parent=23 // pred_fallthru
        _
    $region24: #{conv_relu_forward.2} parent=5 // pred_fallthru
      _
    %p192 = scmp.le.s32.totalorder 1, %s12
    %p193 = scmp.lt.s32.totalorder %s12, 3
    %p194 = pnand %p192, %p193
    %p195 = pneg %p194
    // Predicated region
    $region29: #{conv_relu_forward.2} parent=5 // pred_check
      _
    $region30: #{conv_relu_forward.2} parent=5 // pred_check_branch
      %197 = sbr.rel (%p194) target = $region32
    $region31: #{conv_relu_forward.2} parent=5 // pred_region
      %s198 = ssub.s32 %s12, 1
      %s199 = smul.u32 32, %s17
      %p200 = scmp.lt.s32.totalorder %s199, 63
      %s201 = scalar_select %p200, %s199, 63
      %s202 = smul.addr %s201, 4
      %s203 = scalar_lea.vmem %s0, %s202
      %p204 = pneg %p38
      %p205 = pneg %p35
      %p206 = pneg %p59
      %p207 = pneg %p56
      %p208 = pneg %p80
      %p209 = pneg %p77
      %p210 = pneg %p106
      %p211 = pneg %p103
      %s212 = smul.u32 32, %s17
      %p213 = scmp.lt.s32.totalorder %s212, 63
      %s214 = scalar_select %p213, %s212, 63
      %s215 = smul.addr %s214, 4
      %s216 = scalar_lea.vmem %s3, %s215
      %p217 = pneg %p132
      %p218 = pneg %p129
      %p219 = scmp.lt.s32.totalorder %s17, 1
      %s220 = scalar_select %p219, %s17, 1
      %s221 = scalar_lea.vmem %s4, %s220
      %p222 = pneg %p158
      %p223 = pneg %p155
      %p224 = scmp.lt.s32.totalorder %s17, 1
      %s225 = scalar_select %p224, %s17, 1
      %s226 = scalar_lea.vmem %s5, %s225
      %s227 = smul.u32 32, %s17
      %p228 = scmp.lt.s32.totalorder %s227, 63
      %s229 = scalar_select %p228, %s227, 63
      %s230 = smul.addr %s229, 4
      %s231 = scalar_lea.vmem %s0, %s230
      %s232 = smul.u32 32, %s17
      %s233 = smul.u32 32, %s17
      %p234 = scmp.lt.s32.totalorder %s233, 63
      %s235 = scalar_select %p234, %s233, 63
      %s236 = smul.addr %s235, 4
      %s237 = scalar_lea.vmem %s3, %s236
      %s238 = smul.u32 32, %s17
      %p239 = scmp.lt.s32.totalorder %s17, 1
      %s240 = scalar_select %p239, %s17, 1
      %s241 = scalar_lea.vmem %s4, %s240
      %p242 = scmp.lt.s32.totalorder %s17, 1
      %s243 = scalar_select %p242, %s17, 1
      %s244 = scalar_lea.vmem %s5, %s243
      %v246 = vld [vmem:[%s231] sm:$0xf]
      %v247 = vld [vmem:[%s231 + $0x4] sm:$0xf]
      %v248 = vld [vmem:[%s231 + $0x8] sm:$0xf]
      %v249 = vld [vmem:[%s231 + $0xc] sm:$0xf]
      %v250 = vld [vmem:[%s231 + $0x10] sm:$0xf]
      %v251 = vld [vmem:[%s231 + $0x14] sm:$0xf]
      %v252 = vld [vmem:[%s231 + $0x18] sm:$0xf]
      %v253 = vld [vmem:[%s231 + $0x1c] sm:$0xf]
      %v254 = vld [vmem:[%s231 + $0x20] sm:$0xf]
      %v255 = vld [vmem:[%s231 + $0x24] sm:$0xf]
      %v256 = vld [vmem:[%s231 + $0x28] sm:$0xf]
      %v257 = vld [vmem:[%s231 + $0x2c] sm:$0xf]
      %v258 = vld [vmem:[%s231 + $0x30] sm:$0xf]
      %v259 = vld [vmem:[%s231 + $0x34] sm:$0xf]
      %v260 = vld [vmem:[%s231 + $0x38] sm:$0xf]
      %v261 = vld [vmem:[%s231 + $0x3c] sm:$0xf]
      %v262 = vld [vmem:[%s231 + $0x40] sm:$0xf]
      %v263 = vld [vmem:[%s231 + $0x44] sm:$0xf]
      %v264 = vld [vmem:[%s231 + $0x48] sm:$0xf]
      %v265 = vld [vmem:[%s231 + $0x4c] sm:$0xf]
      %v266 = vld [vmem:[%s231 + $0x50] sm:$0xf]
      %v267 = vld [vmem:[%s231 + $0x54] sm:$0xf]
      %v268 = vld [vmem:[%s231 + $0x58] sm:$0xf]
      %v269 = vld [vmem:[%s231 + $0x5c] sm:$0xf]
      %v270 = vld [vmem:[%s231 + $0x60] sm:$0xf]
      %v271 = vld [vmem:[%s231 + $0x64] sm:$0xf]
      %v272 = vld [vmem:[%s231 + $0x68] sm:$0xf]
      %v273 = vld [vmem:[%s231 + $0x6c] sm:$0xf]
      %v274 = vld [vmem:[%s231 + $0x70] sm:$0xf]
      %v275 = vld [vmem:[%s231 + $0x74] sm:$0xf]
      %v276 = vld [vmem:[%s231 + $0x78] sm:$0xf]
      %v277 = vld [vmem:[%s231 + $0x7c] sm:$0xf]
      %v278 = vld [vmem:[%s1] sm:$0xf]
      %v279 = vld [vmem:[%s1 + $0x4] sm:$0xf]
      %v280 = vld [vmem:[%s1 + $0x8] sm:$0xf]
      %v281 = vld [vmem:[%s1 + $0xc] sm:$0xf]
      %v282 = vld [vmem:[%s1 + $0x10] sm:$0x3]
      %v283 = vld [vmem:[%s2] sm:$0x1]
      %v285 = vperm.slane %v283, 0
      %v319 = vunpack.c.l.b16 %v246
      %v320 = vunpack.c.l.b16 %v247
      %v321 = vunpack.c.l.b16 %v248
      %v322 = vunpack.c.l.b16 %v249
      %v323 = vunpack.c.l.b16 %v250
      %v324 = vunpack.c.l.b16 %v251
      %v325 = vunpack.c.l.b16 %v252
      %v326 = vunpack.c.l.b16 %v253
      %v327 = vunpack.c.l.b16 %v254
      %v328 = vunpack.c.l.b16 %v255
      %v329 = vunpack.c.l.b16 %v256
      %v330 = vunpack.c.l.b16 %v257
      %v331 = vunpack.c.l.b16 %v258
      %v332 = vunpack.c.l.b16 %v259
      %v333 = vunpack.c.l.b16 %v260
      %v334 = vunpack.c.l.b16 %v261
      %v335 = vunpack.c.l.b16 %v262
      %v336 = vunpack.c.l.b16 %v263
      %v337 = vunpack.c.l.b16 %v264
      %v338 = vunpack.c.l.b16 %v265
      %v339 = vunpack.c.l.b16 %v266
      %v340 = vunpack.c.l.b16 %v267
      %v341 = vunpack.c.l.b16 %v268
      %v342 = vunpack.c.l.b16 %v269
      %v343 = vunpack.c.l.b16 %v270
      %v344 = vunpack.c.l.b16 %v271
      %v345 = vunpack.c.l.b16 %v272
      %v346 = vunpack.c.l.b16 %v273
      %v347 = vunpack.c.l.b16 %v274
      %v348 = vunpack.c.l.b16 %v275
      %v349 = vunpack.c.l.b16 %v276
      %v350 = vunpack.c.l.b16 %v277
      %v351 = vpack.c.b16 %v320, %v319
      %v352 = vpack.c.b16 %v322, %v321
      %v353 = vpack.c.b16 %v324, %v323
      %v354 = vpack.c.b16 %v326, %v325
      %v355 = vpack.c.b16 %v328, %v327
      %v356 = vpack.c.b16 %v330, %v329
      %v357 = vpack.c.b16 %v332, %v331
      %v358 = vpack.c.b16 %v334, %v333
      %v359 = vpack.c.b16 %v336, %v335
      %v360 = vpack.c.b16 %v338, %v337
      %v361 = vpack.c.b16 %v340, %v339
      %v362 = vpack.c.b16 %v342, %v341
      %v363 = vpack.c.b16 %v344, %v343
      %v364 = vpack.c.b16 %v346, %v345
      %v365 = vpack.c.b16 %v348, %v347
      %v366 = vpack.c.b16 %v350, %v349
      %v372 = vunpack.c.l.b16 %v278
      %v373 = vunpack.c.l.b16 %v279
      %v374 = vunpack.c.l.b16 %v280
      %v375 = vunpack.c.l.b16 %v281
      %v376 = vunpack.c.l.b16 %v282
      %v377 = vpack.c.b16 %v373, %v372
      %v378 = vpack.c.b16 %v375, %v374
      %v379 = vpack.c.b16 %v376, %v376
      %vm382 = vcmask 293888
      %v384 = vsel %vm382, %v351, 0
      %v387 = vsel %vm382, %v352, 0
      %v390 = vsel %vm382, %v353, 0
      %v393 = vsel %vm382, %v354, 0
      %v396 = vsel %vm382, %v355, 0
      %v399 = vsel %vm382, %v356, 0
      %v402 = vsel %vm382, %v357, 0
      %v405 = vsel %vm382, %v358, 0
      %v408 = vsel %vm382, %v359, 0
      %v411 = vsel %vm382, %v360, 0
      %v414 = vsel %vm382, %v361, 0
      %v417 = vsel %vm382, %v362, 0
      %v420 = vsel %vm382, %v363, 0
      %v423 = vsel %vm382, %v364, 0
      %v426 = vsel %vm382, %v365, 0
      %v429 = vsel %vm382, %v366, 0
      %vm431 = vcmask 1041408
      %v433 = vsel %vm431, %v379, 0
      %435 = vmatpush.bf16.msra.mxu0 0
      %436 = vmatpush.bf16.msra.mxu0 0
      %437 = vmatpush.bf16.msra.mxu0 0
      %438 = vmatpush.bf16.msra.mxu0 0
      %439 = vmatpush.bf16.msra.mxu0 0
      %440 = vmatpush.bf16.msra.mxu0 %v433
      %441 = vmatpush.bf16.msra.mxu0 %v378
      %442 = vmatpush.bf16.msra.mxu0 %v377
      %443 = vmatmul.bf16.gmra.mxu0 %v384
      %v444 = vpop.f32.mrf.mxu0
      %v445 = vadd.f32 %v285, %v444
      %v446 = vpop.f32.mrf.mxu0
      %v447 = vadd.f32 %v285, %v446
      %448 = vmatmul.bf16.gmra.mxu0 %v387
      %v449 = vpop.f32.mrf.mxu0
      %v450 = vadd.f32 %v285, %v449
      %v451 = vpop.f32.mrf.mxu0
      %v452 = vadd.f32 %v285, %v451
      %453 = vmatmul.bf16.gmra.mxu0 %v390
      %v454 = vpop.f32.mrf.mxu0
      %v455 = vadd.f32 %v285, %v454
      %v456 = vpop.f32.mrf.mxu0
      %v457 = vadd.f32 %v285, %v456
      %458 = vmatmul.bf16.gmra.mxu0 %v393
      %v459 = vpop.f32.mrf.mxu0
      %v460 = vadd.f32 %v285, %v459
      %v461 = vpop.f32.mrf.mxu0
      %v462 = vadd.f32 %v285, %v461
      %463 = vmatmul.bf16.gmra.mxu0 %v396
      %v464 = vpop.f32.mrf.mxu0
      %v465 = vadd.f32 %v285, %v464
      %v466 = vpop.f32.mrf.mxu0
      %v467 = vadd.f32 %v285, %v466
      %468 = vmatmul.bf16.gmra.mxu0 %v399
      %v469 = vpop.f32.mrf.mxu0
      %v470 = vadd.f32 %v285, %v469
      %v471 = vpop.f32.mrf.mxu0
      %v472 = vadd.f32 %v285, %v471
      %473 = vmatmul.bf16.gmra.mxu0 %v402
      %v474 = vpop.f32.mrf.mxu0
      %v475 = vadd.f32 %v285, %v474
      %v476 = vpop.f32.mrf.mxu0
      %v477 = vadd.f32 %v285, %v476
      %478 = vmatmul.bf16.gmra.mxu0 %v405
      %v479 = vpop.f32.mrf.mxu0
      %v480 = vadd.f32 %v285, %v479
      %v481 = vpop.f32.mrf.mxu0
      %v482 = vadd.f32 %v285, %v481
      %483 = vmatmul.bf16.gmra.mxu0 %v408
      %v484 = vpop.f32.mrf.mxu0
      %v485 = vadd.f32 %v285, %v484
      %v486 = vpop.f32.mrf.mxu0
      %v487 = vadd.f32 %v285, %v486
      %488 = vmatmul.bf16.gmra.mxu0 %v411
      %v489 = vpop.f32.mrf.mxu0
      %v490 = vadd.f32 %v285, %v489
      %v491 = vpop.f32.mrf.mxu0
      %v492 = vadd.f32 %v285, %v491
      %493 = vmatmul.bf16.gmra.mxu0 %v414
      %v494 = vpop.f32.mrf.mxu0
      %v495 = vadd.f32 %v285, %v494
      %v496 = vpop.f32.mrf.mxu0
      %v497 = vadd.f32 %v285, %v496
      %498 = vmatmul.bf16.gmra.mxu0 %v417
      %v499 = vpop.f32.mrf.mxu0
      %v500 = vadd.f32 %v285, %v499
      %v501 = vpop.f32.mrf.mxu0
      %v502 = vadd.f32 %v285, %v501
      %503 = vmatmul.bf16.gmra.mxu0 %v420
      %v504 = vpop.f32.mrf.mxu0
      %v505 = vadd.f32 %v285, %v504
      %v506 = vpop.f32.mrf.mxu0
      %v507 = vadd.f32 %v285, %v506
      %508 = vmatmul.bf16.gmra.mxu0 %v423
      %v509 = vpop.f32.mrf.mxu0
      %v510 = vadd.f32 %v285, %v509
      %v511 = vpop.f32.mrf.mxu0
      %v512 = vadd.f32 %v285, %v511
      %513 = vmatmul.bf16.gmra.mxu0 %v426
      %v514 = vpop.f32.mrf.mxu0
      %v515 = vadd.f32 %v285, %v514
      %v516 = vpop.f32.mrf.mxu0
      %v517 = vadd.f32 %v285, %v516
      %518 = vmatmul.bf16.gmra.mxu0 %v429
      %v519 = vpop.f32.mrf.mxu0
      %v520 = vadd.f32 %v285, %v519
      %v521 = vpop.f32.mrf.mxu0
      %v522 = vadd.f32 %v285, %v521
      %523 = vdwg.mxu0
      %v524 = vpack.c.bf16 %v445, %v445
      %v525 = vpack.c.bf16 %v447, %v447
      %v526 = vpack.c.bf16 %v450, %v450
      %v527 = vpack.c.bf16 %v452, %v452
      %v528 = vpack.c.bf16 %v455, %v455
      %v529 = vpack.c.bf16 %v457, %v457
      %v530 = vpack.c.bf16 %v460, %v460
      %v531 = vpack.c.bf16 %v462, %v462
      %v532 = vpack.c.bf16 %v465, %v465
      %v533 = vpack.c.bf16 %v467, %v467
      %v534 = vpack.c.bf16 %v470, %v470
      %v535 = vpack.c.bf16 %v472, %v472
      %v536 = vpack.c.bf16 %v475, %v475
      %v537 = vpack.c.bf16 %v477, %v477
      %v538 = vpack.c.bf16 %v480, %v480
      %v539 = vpack.c.bf16 %v482, %v482
      %v540 = vpack.c.bf16 %v485, %v485
      %v541 = vpack.c.bf16 %v487, %v487
      %v542 = vpack.c.bf16 %v490, %v490
      %v543 = vpack.c.bf16 %v492, %v492
      %v544 = vpack.c.bf16 %v495, %v495
      %v545 = vpack.c.bf16 %v497, %v497
      %v546 = vpack.c.bf16 %v500, %v500
      %v547 = vpack.c.bf16 %v502, %v502
      %v548 = vpack.c.bf16 %v505, %v505
      %v549 = vpack.c.bf16 %v507, %v507
      %v550 = vpack.c.bf16 %v510, %v510
      %v551 = vpack.c.bf16 %v512, %v512
      %v552 = vpack.c.bf16 %v515, %v515
      %v553 = vpack.c.bf16 %v517, %v517
      %v554 = vpack.c.bf16 %v520, %v520
      %v555 = vpack.c.bf16 %v522, %v522
      %556 = vst [vmem:[%s237] sm:$0xf] %v524
      %557 = vst [vmem:[%s237 + $0x4] sm:$0xf] %v525
      %558 = vst [vmem:[%s237 + $0x8] sm:$0xf] %v526
      %559 = vst [vmem:[%s237 + $0xc] sm:$0xf] %v527
      %560 = vst [vmem:[%s237 + $0x10] sm:$0xf] %v528
      %561 = vst [vmem:[%s237 + $0x14] sm:$0xf] %v529
      %562 = vst [vmem:[%s237 + $0x18] sm:$0xf] %v530
      %563 = vst [vmem:[%s237 + $0x1c] sm:$0xf] %v531
      %564 = vst [vmem:[%s237 + $0x20] sm:$0xf] %v532
      %565 = vst [vmem:[%s237 + $0x24] sm:$0xf] %v533
      %566 = vst [vmem:[%s237 + $0x28] sm:$0xf] %v534
      %567 = vst [vmem:[%s237 + $0x2c] sm:$0xf] %v535
      %568 = vst [vmem:[%s237 + $0x30] sm:$0xf] %v536
      %569 = vst [vmem:[%s237 + $0x34] sm:$0xf] %v537
      %570 = vst [vmem:[%s237 + $0x38] sm:$0xf] %v538
      %571 = vst [vmem:[%s237 + $0x3c] sm:$0xf] %v539
      %572 = vst [vmem:[%s237 + $0x40] sm:$0xf] %v540
      %573 = vst [vmem:[%s237 + $0x44] sm:$0xf] %v541
      %574 = vst [vmem:[%s237 + $0x48] sm:$0xf] %v542
      %575 = vst [vmem:[%s237 + $0x4c] sm:$0xf] %v543
      %576 = vst [vmem:[%s237 + $0x50] sm:$0xf] %v544
      %577 = vst [vmem:[%s237 + $0x54] sm:$0xf] %v545
      %578 = vst [vmem:[%s237 + $0x58] sm:$0xf] %v546
      %579 = vst [vmem:[%s237 + $0x5c] sm:$0xf] %v547
      %580 = vst [vmem:[%s237 + $0x60] sm:$0xf] %v548
      %581 = vst [vmem:[%s237 + $0x64] sm:$0xf] %v549
      %582 = vst [vmem:[%s237 + $0x68] sm:$0xf] %v550
      %583 = vst [vmem:[%s237 + $0x6c] sm:$0xf] %v551
      %584 = vst [vmem:[%s237 + $0x70] sm:$0xf] %v552
      %585 = vst [vmem:[%s237 + $0x74] sm:$0xf] %v553
      %586 = vst [vmem:[%s237 + $0x78] sm:$0xf] %v554
      %587 = vst [vmem:[%s237 + $0x7c] sm:$0xf] %v555
      %v588 = vadd.f32 %v445, %v447
      %v589 = vadd.f32 %v588, %v450
      %v590 = vadd.f32 %v589, %v452
      %v591 = vadd.f32 %v590, %v455
      %v592 = vadd.f32 %v591, %v457
      %v593 = vadd.f32 %v592, %v460
      %v594 = vadd.f32 %v593, %v462
      %v595 = vadd.f32 %v594, %v465
      %v596 = vadd.f32 %v595, %v467
      %v597 = vadd.f32 %v596, %v470
      %v598 = vadd.f32 %v597, %v472
      %v599 = vadd.f32 %v598, %v475
      %v600 = vadd.f32 %v599, %v477
      %v601 = vadd.f32 %v600, %v480
      %v602 = vadd.f32 %v601, %v482
      %v603 = vadd.f32 %v602, %v485
      %v604 = vadd.f32 %v603, %v487
      %v605 = vadd.f32 %v604, %v490
      %v606 = vadd.f32 %v605, %v492
      %v607 = vadd.f32 %v606, %v495
      %v608 = vadd.f32 %v607, %v497
      %v609 = vadd.f32 %v608, %v500
      %v610 = vadd.f32 %v609, %v502
      %v611 = vadd.f32 %v610, %v505
      %v612 = vadd.f32 %v611, %v507
      %v613 = vadd.f32 %v612, %v510
      %v614 = vadd.f32 %v613, %v512
      %v615 = vadd.f32 %v614, %v515
      %v616 = vadd.f32 %v615, %v517
      %v617 = vadd.f32 %v616, %v520
      %v618 = vadd.f32 %v617, %v522
      %v619 = vrot.slane %v618, 4
      %v620 = vadd.f32 %v618, %v619
      %v621 = vrot.slane %v620, 2
      %v622 = vadd.f32 %v620, %v621
      %v623 = vrot.slane %v622, 1
      %v624 = vadd.f32 %v622, %v623
      %625 = vst [vmem:[%s241] sm:$0x1] %v624
      %v626 = vmul.f32 %v445, %v445
      %v627 = vmul.f32 %v447, %v447
      %v628 = vmul.f32 %v450, %v450
      %v629 = vmul.f32 %v452, %v452
      %v630 = vmul.f32 %v455, %v455
      %v631 = vmul.f32 %v457, %v457
      %v632 = vmul.f32 %v460, %v460
      %v633 = vmul.f32 %v462, %v462
      %v634 = vmul.f32 %v465, %v465
      %v635 = vmul.f32 %v467, %v467
      %v636 = vmul.f32 %v470, %v470
      %v637 = vmul.f32 %v472, %v472
      %v638 = vmul.f32 %v475, %v475
      %v639 = vmul.f32 %v477, %v477
      %v640 = vmul.f32 %v480, %v480
      %v641 = vmul.f32 %v482, %v482
      %v642 = vmul.f32 %v485, %v485
      %v643 = vmul.f32 %v487, %v487
      %v644 = vmul.f32 %v490, %v490
      %v645 = vmul.f32 %v492, %v492
      %v646 = vmul.f32 %v495, %v495
      %v647 = vmul.f32 %v497, %v497
      %v648 = vmul.f32 %v500, %v500
      %v649 = vmul.f32 %v502, %v502
      %v650 = vmul.f32 %v505, %v505
      %v651 = vmul.f32 %v507, %v507
      %v652 = vmul.f32 %v510, %v510
      %v653 = vmul.f32 %v512, %v512
      %v654 = vmul.f32 %v515, %v515
      %v655 = vmul.f32 %v517, %v517
      %v656 = vmul.f32 %v520, %v520
      %v657 = vmul.f32 %v522, %v522
      %v658 = vadd.f32 %v626, %v627
      %v659 = vadd.f32 %v658, %v628
      %v660 = vadd.f32 %v659, %v629
      %v661 = vadd.f32 %v660, %v630
      %v662 = vadd.f32 %v661, %v631
      %v663 = vadd.f32 %v662, %v632
      %v664 = vadd.f32 %v663, %v633
      %v665 = vadd.f32 %v664, %v634
      %v666 = vadd.f32 %v665, %v635
      %v667 = vadd.f32 %v666, %v636
      %v668 = vadd.f32 %v667, %v637
      %v669 = vadd.f32 %v668, %v638
      %v670 = vadd.f32 %v669, %v639
      %v671 = vadd.f32 %v670, %v640
      %v672 = vadd.f32 %v671, %v641
      %v673 = vadd.f32 %v672, %v642
      %v674 = vadd.f32 %v673, %v643
      %v675 = vadd.f32 %v674, %v644
      %v676 = vadd.f32 %v675, %v645
      %v677 = vadd.f32 %v676, %v646
      %v678 = vadd.f32 %v677, %v647
      %v679 = vadd.f32 %v678, %v648
      %v680 = vadd.f32 %v679, %v649
      %v681 = vadd.f32 %v680, %v650
      %v682 = vadd.f32 %v681, %v651
      %v683 = vadd.f32 %v682, %v652
      %v684 = vadd.f32 %v683, %v653
      %v685 = vadd.f32 %v684, %v654
      %v686 = vadd.f32 %v685, %v655
      %v687 = vadd.f32 %v686, %v656
      %v688 = vadd.f32 %v687, %v657
      %v689 = vrot.slane %v688, 4
      %v690 = vadd.f32 %v688, %v689
      %v691 = vrot.slane %v690, 2
      %v692 = vadd.f32 %v690, %v691
      %v693 = vrot.slane %v692, 1
      %v694 = vadd.f32 %v692, %v693
      %695 = vst [vmem:[%s244] sm:$0x1] %v694
      %s696 = smul.u32 32, %s17
      %p697 = scmp.lt.s32.totalorder %s696, 63
      %s698 = scalar_select %p697, %s696, 63
      %s699 = smul.addr %s698, 4
      %s700 = scalar_lea.vmem %s3, %s699
      %p701 = scmp.lt.s32.totalorder %s17, 1
      %s702 = scalar_select %p701, %s17, 1
      %s703 = scalar_lea.vmem %s4, %s702
      %p704 = scmp.lt.s32.totalorder %s17, 1
      %s705 = scalar_select %p704, %s17, 1
      %s706 = scalar_lea.vmem %s5, %s705
      // Predicated region
      $region33: #{conv_relu_forward.2} parent=31 // pred_check
        %p707 = pneg %p103
      $region34: #{conv_relu_forward.2} parent=31 // pred_check_branch
        %709 = sbr.rel (%p707) target = $region36
      $region35: #{conv_relu_forward.2} parent=31 // pred_region
        %s710 = smul.u32 32, %s17
      $region36: #{conv_relu_forward.2} parent=31 // pred_fallthru
        _
      // Predicated region
      $region37: #{conv_relu_forward.2} parent=31 // pred_check
        %p711 = pneg %p129
      $region38: #{conv_relu_forward.2} parent=31 // pred_check_branch
        %713 = sbr.rel (%p711) target = $region40
      $region39: #{conv_relu_forward.2} parent=31 // pred_region
        _
      $region40: #{conv_relu_forward.2} parent=31 // pred_fallthru
        _
      // Predicated region
      $region41: #{conv_relu_forward.2} parent=31 // pred_check
        %p714 = pneg %p155
      $region42: #{conv_relu_forward.2} parent=31 // pred_check_branch
        %716 = sbr.rel (%p714) target = $region44
      $region43: #{conv_relu_forward.2} parent=31 // pred_region
        _
      $region44: #{conv_relu_forward.2} parent=31 // pred_fallthru
        _
    $region32: #{conv_relu_forward.2} parent=5 // pred_fallthru
      _
    %p717 = scmp.le.s32.totalorder 2, %s12
    // Predicated region
    $region45: #{conv_relu_forward.2} parent=5 // pred_check
      %p718 = pneg %p717
    $region46: #{conv_relu_forward.2} parent=5 // pred_check_branch
      %720 = sbr.rel (%p718) target = $region48
    $region47: #{conv_relu_forward.2} parent=5 // pred_region
      %s721 = ssub.s32 %s12, 2
      // Predicated region
      $region49: #{conv_relu_forward.2} parent=47 // pred_check
        %p722 = pneg %p109
      $region50: #{conv_relu_forward.2} parent=47 // pred_check_branch
        %724 = sbr.rel (%p722) target = $region52
      $region51: #{conv_relu_forward.2} parent=47 // pred_region
        %s725 = smul.u32 32, %s18
        %p726 = scmp.lt.s32.totalorder %s725, 63
        %s727 = scalar_select %p726, %s725, 63
        %s728 = smul.addr %s727, 4
        %s729 = scalar_lea.vmem %s3, %s728
      $region52: #{conv_relu_forward.2} parent=47 // pred_fallthru
        _
      // Predicated region
      $region53: #{conv_relu_forward.2} parent=47 // pred_check
        %p730 = pneg %p135
      $region54: #{conv_relu_forward.2} parent=47 // pred_check_branch
        %732 = sbr.rel (%p730) target = $region56
      $region55: #{conv_relu_forward.2} parent=47 // pred_region
        %p733 = scmp.lt.s32.totalorder %s18, 1
        %s734 = scalar_select %p733, %s18, 1
        %s735 = scalar_lea.vmem %s4, %s734
      $region56: #{conv_relu_forward.2} parent=47 // pred_fallthru
        _
      // Predicated region
      $region57: #{conv_relu_forward.2} parent=47 // pred_check
        %p736 = pneg %p161
      $region58: #{conv_relu_forward.2} parent=47 // pred_check_branch
        %738 = sbr.rel (%p736) target = $region60
      $region59: #{conv_relu_forward.2} parent=47 // pred_region
        %p739 = scmp.lt.s32.totalorder %s18, 1
        %s740 = scalar_select %p739, %s18, 1
        %s741 = scalar_lea.vmem %s5, %s740
      $region60: #{conv_relu_forward.2} parent=47 // pred_fallthru
        _
    $region48: #{conv_relu_forward.2} parent=5 // pred_fallthru
      _
  $region6: #{conv_relu_forward.2} parent=0 // loop_footer
    %s16 = sadd.s32 1, %s12
  $region7: #{conv_relu_forward.2} parent=0 // loop_footer_branch
    %11 = sbr.rel target = $region3
  $region8: #{conv_relu_forward.2} parent=0 // loop_exit
    _

</llo_original>
